<compile_context>
chip_gen: v7x
topology: tpu7x:2x2x1
jax: 0.10.0
libtpu: 0.0.40
codegen_flags: <defaults>
</compile_context>

<pallas_src>
import jax
import jax.numpy as jnp
import numpy as np
from jax.experimental import pallas as pl
from jax.experimental.pallas import tpu as pltpu


# ---------------------------------------------------------------------------
# Basis construction (deterministic, mirrors make_basis in the PyTorch code).
# Pure setup / glue — stays in plain numpy/JAX.
# ---------------------------------------------------------------------------
def make_basis(n_dim: int, n_basis: int) -> jnp.ndarray:
    if n_basis % 2 != 0:
        raise ValueError("Number of basis vectors must be even")
    # torch.linspace(0, 1, n_dim + 1) * 2*pi, drop last point
    x = np.linspace(0.0, 1.0, n_dim + 1, dtype=np.float32)[:-1] * (2.0 * np.pi)
    x = np.tile(x[None, :], (n_basis // 2, 1))                      # (n_basis/2, n_dim)
    freqs = np.arange(1, n_basis // 2 + 1, dtype=np.float32)[:, None]
    x = x * freqs
    cos = np.cos(x)
    sin = np.sin(x)
    cos = cos / np.linalg.norm(cos, axis=1, keepdims=True)
    sin = sin / np.linalg.norm(sin, axis=1, keepdims=True)
    basis = np.concatenate((cos, sin), axis=0)                       # (n_basis, n_dim)
    return jnp.asarray(basis, dtype=jnp.float32)


# ---------------------------------------------------------------------------
# Pallas kernel: row-normalize coeffs (rsqrt * mul) then matmul with the basis.
# Operates on one (tile_v, n_basis) row tile per grid step.
# ---------------------------------------------------------------------------
def _parametrized_vector_kernel(coeffs_ref, basis_ref, out_ref):
    c = coeffs_ref[...]                                              # (tile_v, n_basis)
    # 1/||c||_row via exact rsqrt (EUP) + broadcast multiply (VPU).
    # NOTE: zero rows give inf -> NaN output, matching torch.norm semantics.
    inv_norm = jax.lax.rsqrt(jnp.sum(c * c, axis=1, keepdims=True))  # (tile_v, 1)

    n_basis = c.shape[1]
    n_dim = basis_ref.shape[1]
    if n_basis <= n_dim:
        # Scale the smaller operand (input side).
        out = jnp.dot(c * inv_norm, basis_ref[...],
                      preferred_element_type=jnp.float32)
    else:
        # Wide-basis configs: scale the (smaller) output side instead.
        out = jnp.dot(c, basis_ref[...],
                      preferred_element_type=jnp.float32) * inv_norm
    out_ref[...] = out.astype(out_ref.dtype)


def parametrized_vector_forward(coeffs: jnp.ndarray,
                                basis: jnp.ndarray,
                                *,
                                tile_v: int = 512) -> jnp.ndarray:
    """out = (coeffs / ||coeffs||_row) @ basis, tiled over rows of coeffs."""
    n_vecs, n_basis = coeffs.shape
    n_basis_b, n_dim = basis.shape
    assert n_basis == n_basis_b, "coeffs / basis n_basis mismatch"

    # Row tile: multiple of 8 sublanes. If n_vecs is smaller than the tile,
    # fall back to a single full-extent block (exempt from the (8,128) rule).
    if n_vecs >= tile_v:
        tv = tile_v
    else:
        tv = n_vecs
    grid_v = pl.cdiv(n_vecs, tv)

    # VMEM budget: double-buffered coeffs tile + double-buffered out tile
    # + resident basis, with generous headroom (keeps pipelining alive on
    # v7x's 64 MiB VMEM without relying on the scoped default).
    per_step_bytes = (2 * tv * n_basis * 4
                      + 2 * tv * n_dim * 4
                      + n_basis * n_dim * 4)
    vmem_limit = int(min(max(4 * per_step_bytes, 16 * 2**20), 48 * 2**20))

    return pl.pallas_call(
        _parametrized_vector_kernel,
        out_shape=jax.ShapeDtypeStruct((n_vecs, n_dim), coeffs.dtype),
        grid_spec=pltpu.PrefetchScalarGridSpec(
            num_scalar_prefetch=0,
            grid=(grid_v,),
            in_specs=[
                # Row tile of coeffs, marches with the grid.
                pl.BlockSpec((tv, n_basis), lambda i: (i, 0)),
                # Basis: constant block index -> stays VMEM-resident.
                pl.BlockSpec((n_basis, n_dim), lambda i: (0, 0)),
            ],
            out_specs=pl.BlockSpec((tv, n_dim), lambda i: (i, 0)),
        ),
        compiler_params=pltpu.CompilerParams(
            dimension_semantics=("parallel",),
            vmem_limit_bytes=vmem_limit,
        ),
    )(coeffs, basis)


if __name__ == "__main__":
    # Small, module-consistent shapes; n_vecs chosen so the row grid actually
    # has several steps (4) with the demo tile size.
    n_vecs, n_basis, n_dim = 512, 8, 128
    demo_tile_v = 128

    key = jax.random.PRNGKey(0)
    coeffs = jax.random.normal(key, (n_vecs, n_basis), dtype=jnp.float32)

    basis = make_basis(n_dim, n_basis)

    out = parametrized_vector_forward(coeffs, basis, tile_v=demo_tile_v)
    out = jax.block_until_ready(out)

    # Reference check in plain JAX (same math as the PyTorch forward).
    c_norm = coeffs / jnp.linalg.norm(coeffs, axis=1, keepdims=True)
    ref = c_norm @ basis
    np.testing.assert_allclose(np.asarray(out), np.asarray(ref), rtol=1e-5, atol=1e-5)

    print("KERNEL_OK")
</pallas_src>

<mosaic_0001>
module attributes {stable_mosaic.version = 11 : i64} {
  func.func @_parametrized_vector_kernel(%arg0: i32, %arg1: memref<128x8xf32, #tpu.memory_space<vmem>>, %arg2: memref<8x128xf32, #tpu.memory_space<vmem>>, %arg3: memref<128x128xf32, #tpu.memory_space<vmem>>) attributes {dimension_semantics = [#tpu.dimension_semantics<parallel>], iteration_bounds = array<i64: 4>, scalar_prefetch = 0 : i64, scratch_operands = 0 : i64, tpu.core_type = #tpu.core_type<tc>, window_params = [{transform_indices = @transform_0, window_bounds = array<i64: 128, 8>}, {pipeline_mode = #tpu.pipeline_mode<synchronous>, transform_indices = @transform_1, window_bounds = array<i64: 8, 128>}, {transform_indices = @transform_2, window_bounds = array<i64: 128, 128>}]} {
    %c0 = arith.constant 0 : index
    %c0_0 = arith.constant 0 : index
    %0 = vector.load %arg1[%c0, %c0_0] : memref<128x8xf32, #tpu.memory_space<vmem>>, vector<128x8xf32>
    %1 = arith.mulf %0, %0 : vector<128x8xf32>
    %cst = arith.constant dense<0.000000e+00> : vector<128xf32>
    %2 = vector.multi_reduction <add>, %1, %cst [1] : vector<128x8xf32> to vector<128xf32>
    %3 = vector.shape_cast %2 : vector<128xf32> to vector<128x1xf32>
    %4 = math.rsqrt %3 : vector<128x1xf32>
    %5 = vector.broadcast %4 : vector<128x1xf32> to vector<128x8xf32>
    %6 = arith.mulf %0, %5 : vector<128x8xf32>
    %c0_1 = arith.constant 0 : index
    %c0_2 = arith.constant 0 : index
    %7 = vector.load %arg2[%c0_1, %c0_2] : memref<8x128xf32, #tpu.memory_space<vmem>>, vector<8x128xf32>
    %cst_3 = arith.constant dense<0.000000e+00> : vector<128x128xf32>
    %8 = tpu.matmul %6, %7, %cst_3 {dimension_numbers = #tpu.dot_dimension_numbers<[1], [0], [0], [1], [0, 0, 1, 1], [], []>} : vector<128x8xf32>, vector<8x128xf32>, vector<128x128xf32> -> vector<128x128xf32>
    %c0_4 = arith.constant 0 : index
    %c0_5 = arith.constant 0 : index
    %9 = vector.load %arg3[%c0_4, %c0_5] : memref<128x128xf32, #tpu.memory_space<vmem>>, vector<128x128xf32>
    tpu.vector_store %arg3[%c0_4, %c0_5], %8 {strides = array<i32>} : memref<128x128xf32, #tpu.memory_space<vmem>>, vector<128x128xf32>,
    return
  }
  func.func @transform_0(%arg0: i32) -> (i32, i32) {
    %c0_i32 = arith.constant 0 : i32
    %c0_i32_0 = arith.constant 0 : i32
    return %arg0, %c0_i32 : i32, i32
  }
  func.func @transform_1(%arg0: i32) -> (i32, i32) {
    %c0_i32 = arith.constant 0 : i32
    %c0_i32_0 = arith.constant 0 : i32
    %c0_i32_1 = arith.constant 0 : i32
    return %c0_i32, %c0_i32_0 : i32, i32
  }
  func.func @transform_2(%arg0: i32) -> (i32, i32) {
    %c0_i32 = arith.constant 0 : i32
    %c0_i32_0 = arith.constant 0 : i32
    return %arg0, %c0_i32 : i32, i32
  }
}

</mosaic_0001>

<llo_original>
// kernel: tpu_custom_call.1
$region0: #{tpu_custom_call.1}
  #allocation0 [shape = 'u32[]', space=smem, size = 0x4, offset = 0x4, fixed_abs, tag = 'smem constant byte address 0x4 - core index']
  #allocation1 [shape = 'u32[144,128]{1,0:T(1,128)}', space=vmem, size = 0x12000, scoped, tag = 'internal scratch']
  %s0 = inlined_call_operand.vmem [shape: f32[512,8], index: 0, kind: input, shape index: {}]
  %s1 = inlined_call_operand.vmem [shape: f32[8,128], index: 1, kind: input, shape index: {}]
  %s2 = inlined_call_operand.hbm [shape: f32[512,128], index: 2, kind: output, shape index: {}]
  %s3 = sld [smem:[#allocation0]]
  $region41: #{tpu_custom_call.1} parent=0
    _
  %s5 = ssub.s32 1, %s3
  %s6 = scalar_select 0, %s5, %s3
  $region1: #{tpu_custom_call.1} parent=0
    #allocation2 [shape = 'u8[131072]{0}', space=vmem, size = 0x20000, scoped, tag = 'output window, operand 0']
    #allocation3 [shape = 's32[2]{0}', space=sflag, size = 0x8, scoped, tag = 'scoped memory for tpu_custom_call.1']
    %7 = vsyncpa [#allocation3], 0
    %s8 = scalar_lea.sflag [#allocation3], 1
    %9 = vsyncpa %s8, 0
    loop: start=0, step=1, limit=6
    $region2: #{tpu_custom_call.1} parent=1 // loop_pre_header
      _
    $region3: #{tpu_custom_call.1} parent=1 // loop_header
      %s11 = sphi 0, %s15
      %p12 = scmp.ge.s32.totalorder %s11, 6
      %s21 = sphi 0, %s23
      %s24 = sphi 0, %s21
      %s25 = sphi 0, %s24
      %s41 = sphi 0, %s25
      %s45 = sphi 0, %s45
      %s47 = sphi 0, %s45
      %s48 = sphi 0, %s47
      %s62 = sphi 0, %s48
      %s68 = sphi 0, %s70
      %s71 = sphi 0, %s68
      %s72 = sphi 0, %s71
      %s88 = sphi 0, %s72
    $region4: #{tpu_custom_call.1} parent=1 // loop_header_branch
      %14 = sbr.rel (%p12) target = $region8
    $region5: #{tpu_custom_call.1} parent=1 // loop_body
      %s16 = ssub.s32 %s11, 1
      %s17 = ssub.s32 %s11, 2
      %s18 = sadd.s32 %s11, 1
      %s19 = ssub.s32 %s11, %s18
      %p20 = scmp.eq.s32.totalorder %s19, 0
      %s22 = sadd.s32 %s21, 1
      %s23 = scalar_select %p20, %s21, %s22
      %p26 = pneg %p20
      %p27 = scmp.eq.s32.totalorder %s11, 3
      %p28 = por %p26, %p27
      %p29 = scmp.ne.s32.totalorder %s21, %s24
      %p30 = scmp.eq.s32.totalorder %s11, 0
      %p31 = por %p29, %p30
      %p32 = scmp.ne.s32.totalorder %s21, %s24
      %p33 = scmp.eq.s32.totalorder %s16, 3
      %p34 = por %p32, %p33
      %p35 = scmp.ne.s32.totalorder %s24, %s25
      %p36 = scmp.eq.s32.totalorder %s16, 0
      %p37 = por %p35, %p36
      %p38 = scmp.ne.s32.totalorder %s24, %s25
      %p39 = scmp.eq.s32.totalorder %s17, 3
      %p40 = por %p38, %p39
      %p42 = scmp.ne.s32.totalorder %s25, %s41
      %p43 = scmp.eq.s32.totalorder %s17, 0
      %p44 = por %p42, %p43
      %s46 = sadd.s32 %s45, 1
      %p49 = scmp.eq.s32.totalorder %s11, 3
      %p50 = scmp.ne.s32.totalorder %s45, %s47
      %p51 = scmp.eq.s32.totalorder %s11, 0
      %p52 = por %p50, %p51
      %p53 = scmp.ne.s32.totalorder %s45, %s47
      %p54 = scmp.eq.s32.totalorder %s16, 3
      %p55 = por %p53, %p54
      %p56 = scmp.ne.s32.totalorder %s47, %s48
      %p57 = scmp.eq.s32.totalorder %s16, 0
      %p58 = por %p56, %p57
      %p59 = scmp.ne.s32.totalorder %s47, %s48
      %p60 = scmp.eq.s32.totalorder %s17, 3
      %p61 = por %p59, %p60
      %p63 = scmp.ne.s32.totalorder %s48, %s62
      %p64 = scmp.eq.s32.totalorder %s17, 0
      %p65 = por %p63, %p64
      %s66 = ssub.s32 %s11, %s18
      %p67 = scmp.eq.s32.totalorder %s66, 0
      %s69 = sadd.s32 %s68, 1
      %s70 = scalar_select %p67, %s68, %s69
      %p73 = pneg %p67
      %p74 = scmp.eq.s32.totalorder %s11, 3
      %p75 = por %p73, %p74
      %p76 = scmp.ne.s32.totalorder %s68, %s71
      %p77 = scmp.eq.s32.totalorder %s11, 0
      %p78 = por %p76, %p77
      %p79 = scmp.ne.s32.totalorder %s68, %s71
      %p80 = scmp.eq.s32.totalorder %s16, 3
      %p81 = por %p79, %p80
      %p82 = scmp.ne.s32.totalorder %s71, %s72
      %p83 = scmp.eq.s32.totalorder %s16, 0
      %p84 = por %p82, %p83
      %p85 = scmp.ne.s32.totalorder %s71, %s72
      %p86 = scmp.eq.s32.totalorder %s17, 3
      %p87 = por %p85, %p86
      %p89 = scmp.ne.s32.totalorder %s72, %s88
      %p90 = scmp.eq.s32.totalorder %s17, 0
      %p91 = por %p89, %p90
      %p92 = scmp.le.s32.totalorder 1, %s11
      %p93 = scmp.lt.s32.totalorder %s11, 5
      %p94 = pnand %p92, %p93
      %p95 = pneg %p94
      // Predicated region
      $region9: #{tpu_custom_call.1} parent=5 // pred_check
        _
      $region10: #{tpu_custom_call.1} parent=5 // pred_check_branch
        %97 = sbr.rel (%p94) target = $region12
      $region11: #{tpu_custom_call.1} parent=5 // pred_region
        %s98 = ssub.s32 %s11, 1
        // Predicated region
        $region13: #{tpu_custom_call.1} parent=11 // pred_check
          %p99 = pneg %p58
        $region14: #{tpu_custom_call.1} parent=11 // pred_check_branch
          %101 = sbr.rel (%p99) target = $region16
        $region15: #{tpu_custom_call.1} parent=11 // pred_region
          _
        $region16: #{tpu_custom_call.1} parent=11 // pred_fallthru
          _
      $region12: #{tpu_custom_call.1} parent=5 // pred_fallthru
        _
      %p102 = scmp.lt.s32.totalorder %s11, 4
      // Predicated region
      $region17: #{tpu_custom_call.1} parent=5 // pred_check
        %p103 = pneg %p102
      $region18: #{tpu_custom_call.1} parent=5 // pred_check_branch
        %105 = sbr.rel (%p103) target = $region20
      $region19: #{tpu_custom_call.1} parent=5 // pred_region
        // Predicated region
        $region21: #{tpu_custom_call.1} parent=19 // pred_check
          %p106 = pneg %p31
        $region22: #{tpu_custom_call.1} parent=19 // pred_check_branch
          %108 = sbr.rel (%p106) target = $region24
        $region23: #{tpu_custom_call.1} parent=19 // pred_region
          %s109 = smul.u32 16, %s11
          %p110 = scmp.lt.s32.totalorder %s109, 63
          %s111 = scalar_select %p110, %s109, 63
          %s112 = smul.addr %s111, 8
          %s113 = scalar_lea.vmem %s0, %s112
          %s114 = smul.u32 16, %s11
        $region24: #{tpu_custom_call.1} parent=19 // pred_fallthru
          _
      $region20: #{tpu_custom_call.1} parent=5 // pred_fallthru
        _
      %p115 = scmp.le.s32.totalorder 1, %s11
      %p116 = scmp.lt.s32.totalorder %s11, 5
      %p117 = pnand %p115, %p116
      %p118 = pneg %p117
      // Predicated region
      $region25: #{tpu_custom_call.1} parent=5 // pred_check
        _
      $region26: #{tpu_custom_call.1} parent=5 // pred_check_branch
        %120 = sbr.rel (%p117) target = $region28
      $region27: #{tpu_custom_call.1} parent=5 // pred_region
        %s121 = ssub.s32 %s11, 1
        %s122 = smul.u32 16, %s16
        %p123 = scmp.lt.s32.totalorder %s122, 63
        %s124 = scalar_select %p123, %s122, 63
        %s125 = smul.addr %s124, 8
        %s126 = scalar_lea.vmem %s0, %s125
        %p127 = pneg %p37
        %p128 = pneg %p34
        %p129 = pneg %p58
        %p130 = pneg %p55
        %p131 = pneg %p84
        %p132 = pneg %p81
        %s133 = sand.u32 %s71, 1
        %s134 = scalar_lea.sflag [#allocation3], %s133
        %s135 = sand.u32 %s71, 1
        %s136 = smul.addr %s135, 128
        %s137 = scalar_lea.vmem [#allocation2], %s136
        %s138 = smul.u32 16, %s16
        %p139 = scmp.lt.s32.totalorder %s138, 63
        %s140 = scalar_select %p139, %s138, 63
        %s141 = smul.addr %s140, 8
        %s142 = scalar_lea.vmem %s0, %s141
        %s143 = smul.u32 16, %s16
        %s144 = smul.u32 16, %s16
        %v145 = vld [vmem:[%s142] sm:$0xff]
        %v146 = vld [vmem:[%s142 + $0x8] sm:$0xff]
        %v147 = vld [vmem:[%s142 + $0x10] sm:$0xff]
        %v148 = vld [vmem:[%s142 + $0x18] sm:$0xff]
        %v149 = vld [vmem:[%s142 + $0x20] sm:$0xff]
        %v150 = vld [vmem:[%s142 + $0x28] sm:$0xff]
        %v151 = vld [vmem:[%s142 + $0x30] sm:$0xff]
        %v152 = vld [vmem:[%s142 + $0x38] sm:$0xff]
        %v153 = vld [vmem:[%s142 + $0x40] sm:$0xff]
        %v154 = vld [vmem:[%s142 + $0x48] sm:$0xff]
        %v155 = vld [vmem:[%s142 + $0x50] sm:$0xff]
        %v156 = vld [vmem:[%s142 + $0x58] sm:$0xff]
        %v157 = vld [vmem:[%s142 + $0x60] sm:$0xff]
        %v158 = vld [vmem:[%s142 + $0x68] sm:$0xff]
        %v159 = vld [vmem:[%s142 + $0x70] sm:$0xff]
        %v160 = vld [vmem:[%s142 + $0x78] sm:$0xff]
        %v161 = vmul.f32 %v145, %v145
        %v162 = vmul.f32 %v146, %v146
        %v163 = vmul.f32 %v147, %v147
        %v164 = vmul.f32 %v148, %v148
        %v165 = vmul.f32 %v149, %v149
        %v166 = vmul.f32 %v150, %v150
        %v167 = vmul.f32 %v151, %v151
        %v168 = vmul.f32 %v152, %v152
        %v169 = vmul.f32 %v153, %v153
        %v170 = vmul.f32 %v154, %v154
        %v171 = vmul.f32 %v155, %v155
        %v172 = vmul.f32 %v156, %v156
        %v173 = vmul.f32 %v157, %v157
        %v174 = vmul.f32 %v158, %v158
        %v175 = vmul.f32 %v159, %v159
        %v176 = vmul.f32 %v160, %v160
        %vm177 = vcmask 64512
        %v178 = vsel %vm177, %v161, 0.0
        %179 = vadd.xlane.f32.xlu0 %v178
        %v180 = vpop.xlane.xlu0 %179
        %v181 = vsel %vm177, %v162, 0.0
        %182 = vadd.xlane.f32.xlu0 %v181
        %v183 = vpop.xlane.xlu0 %182
        %v184 = vsel %vm177, %v163, 0.0
        %185 = vadd.xlane.f32.xlu0 %v184
        %v186 = vpop.xlane.xlu0 %185
        %v187 = vsel %vm177, %v164, 0.0
        %188 = vadd.xlane.f32.xlu0 %v187
        %v189 = vpop.xlane.xlu0 %188
        %v190 = vsel %vm177, %v165, 0.0
        %191 = vadd.xlane.f32.xlu0 %v190
        %v192 = vpop.xlane.xlu0 %191
        %v193 = vsel %vm177, %v166, 0.0
        %194 = vadd.xlane.f32.xlu0 %v193
        %v195 = vpop.xlane.xlu0 %194
        %v196 = vsel %vm177, %v167, 0.0
        %197 = vadd.xlane.f32.xlu0 %v196
        %v198 = vpop.xlane.xlu0 %197
        %v199 = vsel %vm177, %v168, 0.0
        %200 = vadd.xlane.f32.xlu0 %v199
        %v201 = vpop.xlane.xlu0 %200
        %v202 = vsel %vm177, %v169, 0.0
        %203 = vadd.xlane.f32.xlu0 %v202
        %v204 = vpop.xlane.xlu0 %203
        %v205 = vsel %vm177, %v170, 0.0
        %206 = vadd.xlane.f32.xlu0 %v205
        %v207 = vpop.xlane.xlu0 %206
        %v208 = vsel %vm177, %v171, 0.0
        %209 = vadd.xlane.f32.xlu0 %v208
        %v210 = vpop.xlane.xlu0 %209
        %v211 = vsel %vm177, %v172, 0.0
        %212 = vadd.xlane.f32.xlu0 %v211
        %v213 = vpop.xlane.xlu0 %212
        %v214 = vsel %vm177, %v173, 0.0
        %215 = vadd.xlane.f32.xlu0 %v214
        %v216 = vpop.xlane.xlu0 %215
        %v217 = vsel %vm177, %v174, 0.0
        %218 = vadd.xlane.f32.xlu0 %v217
        %v219 = vpop.xlane.xlu0 %218
        %v220 = vsel %vm177, %v175, 0.0
        %221 = vadd.xlane.f32.xlu0 %v220
        %v222 = vpop.xlane.xlu0 %221
        %v223 = vsel %vm177, %v176, 0.0
        %224 = vadd.xlane.f32.xlu0 %v223
        %v225 = vpop.xlane.xlu0 %224
        %v226 = vrsqrt.pop %v180
        %v227 = vrsqrt.pop %v183
        %v228 = vrsqrt.pop %v186
        %v229 = vrsqrt.pop %v189
        %v230 = vrsqrt.pop %v192
        %v231 = vrsqrt.pop %v195
        %v232 = vrsqrt.pop %v198
        %v233 = vrsqrt.pop %v201
        %v234 = vrsqrt.pop %v204
        %v235 = vrsqrt.pop %v207
        %v236 = vrsqrt.pop %v210
        %v237 = vrsqrt.pop %v213
        %v238 = vrsqrt.pop %v216
        %v239 = vrsqrt.pop %v219
        %v240 = vrsqrt.pop %v222
        %v241 = vrsqrt.pop %v225
        %v242 = vmul.f32 %v145, %v226
        %v243 = vmul.f32 %v146, %v227
        %v244 = vmul.f32 %v147, %v228
        %v245 = vmul.f32 %v148, %v229
        %v246 = vmul.f32 %v149, %v230
        %v247 = vmul.f32 %v150, %v231
        %v248 = vmul.f32 %v151, %v232
        %v249 = vmul.f32 %v152, %v233
        %v250 = vmul.f32 %v153, %v234
        %v251 = vmul.f32 %v154, %v235
        %v252 = vmul.f32 %v155, %v236
        %v253 = vmul.f32 %v156, %v237
        %v254 = vmul.f32 %v157, %v238
        %v255 = vmul.f32 %v158, %v239
        %v256 = vmul.f32 %v159, %v240
        %v257 = vmul.f32 %v160, %v241
        %v258 = vld [vmem:[%s1] sm:$0xff]
        %v260 = vsel %vm177, %v242, 0
        %v263 = vsel %vm177, %v243, 0
        %v266 = vsel %vm177, %v244, 0
        %v269 = vsel %vm177, %v245, 0
        %v272 = vsel %vm177, %v246, 0
        %v275 = vsel %vm177, %v247, 0
        %v278 = vsel %vm177, %v248, 0
        %v281 = vsel %vm177, %v249, 0
        %v284 = vsel %vm177, %v250, 0
        %v287 = vsel %vm177, %v251, 0
        %v290 = vsel %vm177, %v252, 0
        %v293 = vsel %vm177, %v253, 0
        %v296 = vsel %vm177, %v254, 0
        %v299 = vsel %vm177, %v255, 0
        %v302 = vsel %vm177, %v256, 0
        %v305 = vsel %vm177, %v257, 0
        %307 = vmatprep.subr.mxu0 0.0
        %308 = vmatpush1.msra.mxu0 %v258
        %309 = vmatprep.subr.mxu0 0.0
        %310 = vmatpush1.msra.mxu0 0.0
        %311 = vmatprep.subr.mxu0 0.0
        %312 = vmatpush1.msra.mxu0 0.0
        %313 = vmatprep.subr.mxu0 0.0
        %314 = vmatpush1.msra.mxu0 0.0
        %315 = vmatprep.subr.mxu0 0.0
        %316 = vmatpush1.msra.mxu0 0.0
        %317 = vmatprep.subr.mxu0 0.0
        %318 = vmatpush1.msra.mxu0 0.0
        %319 = vmatprep.subr.mxu0 0.0
        %320 = vmatpush1.msra.mxu0 0.0
        %321 = vmatprep.subr.mxu0 0.0
        %322 = vmatpush1.msra.mxu0 0.0
        %323 = vmatprep.subr.mxu0 0.0
        %324 = vmatpush1.msra.mxu0 0.0
        %325 = vmatprep.subr.mxu0 0.0
        %326 = vmatpush1.msra.mxu0 0.0
        %327 = vmatprep.subr.mxu0 0.0
        %328 = vmatpush1.msra.mxu0 0.0
        %329 = vmatprep.subr.mxu0 0.0
        %330 = vmatpush1.msra.mxu0 0.0
        %331 = vmatprep.subr.mxu0 0.0
        %332 = vmatpush1.msra.mxu0 0.0
        %333 = vmatprep.subr.mxu0 0.0
        %334 = vmatpush1.msra.mxu0 0.0
        %335 = vmatprep.subr.mxu0 0.0
        %336 = vmatpush1.msra.mxu0 0.0
        %337 = vmatprep.subr.mxu0 0.0
        %338 = vmatpush1.msra.mxu0 0.0
        %339 = vmatprep.subr.mxu0 0.0
        %340 = vmatpush1.msra.mxu0 0.0
        %341 = vmatprep.subr.mxu0 0.0
        %342 = vmatpush1.msra.mxu0 0.0
        %343 = vmatprep.subr.mxu0 0.0
        %344 = vmatpush1.msra.mxu0 0.0
        %345 = vmatprep.subr.mxu0 0.0
        %346 = vmatpush1.msra.mxu0 0.0
        %347 = vmatprep.subr.mxu0 0.0
        %348 = vmatpush1.msra.mxu0 0.0
        %349 = vmatprep.subr.mxu0 0.0
        %350 = vmatpush1.msra.mxu0 0.0
        %351 = vmatprep.subr.mxu0 0.0
        %352 = vmatpush1.msra.mxu0 0.0
        %353 = vmatprep.subr.mxu0 0.0
        %354 = vmatpush1.msra.mxu0 0.0
        %355 = vmatprep.subr.mxu0 0.0
        %356 = vmatpush1.msra.mxu0 0.0
        %357 = vmatprep.subr.mxu0 0.0
        %358 = vmatpush1.msra.mxu0 0.0
        %359 = vmatprep.subr.mxu0 0.0
        %360 = vmatpush1.msra.mxu0 0.0
        %361 = vmatprep.subr.mxu0 0.0
        %362 = vmatpush1.msra.mxu0 0.0
        %363 = vmatprep.subr.mxu0 0.0
        %364 = vmatpush1.msra.mxu0 0.0
        %365 = vmatprep.subr.mxu0 0.0
        %366 = vmatpush1.msra.mxu0 0.0
        %367 = vmatprep.subr.mxu0 0.0
        %368 = vmatpush1.msra.mxu0 0.0
        %369 = vmatprep.subr.mxu0 0.0
        %370 = vmatpush1.msra.mxu0 0.0
        %371 = vmatprep.mubr.f32.mxu0 0.0
        %372 = vmatmul.mubr.f32.gmra.mrb[0].mxu0 %v260
        %v373 = vpop.f32.mrb[0].mxu0
        %v374 = vadd.f32 0.0, %v373
        %v375 = vpop.f32.mrb[0].mxu0
        %376 = vmatprep.mubr.f32.mxu0 0.0
        %377 = vmatmul.mubr.f32.gmra.mrb[0].mxu0 %v263
        %v378 = vpop.f32.mrb[0].mxu0
        %v379 = vadd.f32 0.0, %v378
        %v380 = vpop.f32.mrb[0].mxu0
        %381 = vmatprep.mubr.f32.mxu0 0.0
        %382 = vmatmul.mubr.f32.gmra.mrb[0].mxu0 %v266
        %v383 = vpop.f32.mrb[0].mxu0
        %v384 = vadd.f32 0.0, %v383
        %v385 = vpop.f32.mrb[0].mxu0
        %386 = vmatprep.mubr.f32.mxu0 0.0
        %387 = vmatmul.mubr.f32.gmra.mrb[0].mxu0 %v269
        %v388 = vpop.f32.mrb[0].mxu0
        %v389 = vadd.f32 0.0, %v388
        %v390 = vpop.f32.mrb[0].mxu0
        %391 = vmatprep.mubr.f32.mxu0 0.0
        %392 = vmatmul.mubr.f32.gmra.mrb[0].mxu0 %v272
        %v393 = vpop.f32.mrb[0].mxu0
        %v394 = vadd.f32 0.0, %v393
        %v395 = vpop.f32.mrb[0].mxu0
        %396 = vmatprep.mubr.f32.mxu0 0.0
        %397 = vmatmul.mubr.f32.gmra.mrb[0].mxu0 %v275
        %v398 = vpop.f32.mrb[0].mxu0
        %v399 = vadd.f32 0.0, %v398
        %v400 = vpop.f32.mrb[0].mxu0
        %401 = vmatprep.mubr.f32.mxu0 0.0
        %402 = vmatmul.mubr.f32.gmra.mrb[0].mxu0 %v278
        %v403 = vpop.f32.mrb[0].mxu0
        %v404 = vadd.f32 0.0, %v403
        %v405 = vpop.f32.mrb[0].mxu0
        %406 = vmatprep.mubr.f32.mxu0 0.0
        %407 = vmatmul.mubr.f32.gmra.mrb[0].mxu0 %v281
        %v408 = vpop.f32.mrb[0].mxu0
        %v409 = vadd.f32 0.0, %v408
        %v410 = vpop.f32.mrb[0].mxu0
        %411 = vmatprep.mubr.f32.mxu0 0.0
        %412 = vmatmul.mubr.f32.gmra.mrb[0].mxu0 %v284
        %v413 = vpop.f32.mrb[0].mxu0
        %v414 = vadd.f32 0.0, %v413
        %v415 = vpop.f32.mrb[0].mxu0
        %416 = vmatprep.mubr.f32.mxu0 0.0
        %417 = vmatmul.mubr.f32.gmra.mrb[0].mxu0 %v287
        %v418 = vpop.f32.mrb[0].mxu0
        %v419 = vadd.f32 0.0, %v418
        %v420 = vpop.f32.mrb[0].mxu0
        %421 = vmatprep.mubr.f32.mxu0 0.0
        %422 = vmatmul.mubr.f32.gmra.mrb[0].mxu0 %v290
        %v423 = vpop.f32.mrb[0].mxu0
        %v424 = vadd.f32 0.0, %v423
        %v425 = vpop.f32.mrb[0].mxu0
        %426 = vmatprep.mubr.f32.mxu0 0.0
        %427 = vmatmul.mubr.f32.gmra.mrb[0].mxu0 %v293
        %v428 = vpop.f32.mrb[0].mxu0
        %v429 = vadd.f32 0.0, %v428
        %v430 = vpop.f32.mrb[0].mxu0
        %431 = vmatprep.mubr.f32.mxu0 0.0
        %432 = vmatmul.mubr.f32.gmra.mrb[0].mxu0 %v296
        %v433 = vpop.f32.mrb[0].mxu0
        %v434 = vadd.f32 0.0, %v433
        %v435 = vpop.f32.mrb[0].mxu0
        %436 = vmatprep.mubr.f32.mxu0 0.0
        %437 = vmatmul.mubr.f32.gmra.mrb[0].mxu0 %v299
        %v438 = vpop.f32.mrb[0].mxu0
        %v439 = vadd.f32 0.0, %v438
        %v440 = vpop.f32.mrb[0].mxu0
        %441 = vmatprep.mubr.f32.mxu0 0.0
        %442 = vmatmul.mubr.f32.gmra.mrb[0].mxu0 %v302
        %v443 = vpop.f32.mrb[0].mxu0
        %v444 = vadd.f32 0.0, %v443
        %v445 = vpop.f32.mrb[0].mxu0
        %446 = vmatprep.mubr.f32.mxu0 0.0
        %447 = vmatmul.mubr.f32.gmra.mrb[0].mxu0 %v305
        %v448 = vpop.f32.mrb[0].mxu0
        %v449 = vadd.f32 0.0, %v448
        %v450 = vpop.f32.mrb[0].mxu0
        %451 = vdwg.mxu0
        %452 = vst [vmem:[%s137] sm:$0xff] %v374
        %453 = vst [vmem:[%s137 + $0x8] sm:$0xff] %v379
        %454 = vst [vmem:[%s137 + $0x10] sm:$0xff] %v384
        %455 = vst [vmem:[%s137 + $0x18] sm:$0xff] %v389
        %456 = vst [vmem:[%s137 + $0x20] sm:$0xff] %v394
        %457 = vst [vmem:[%s137 + $0x28] sm:$0xff] %v399
        %458 = vst [vmem:[%s137 + $0x30] sm:$0xff] %v404
        %459 = vst [vmem:[%s137 + $0x38] sm:$0xff] %v409
        %460 = vst [vmem:[%s137 + $0x40] sm:$0xff] %v414
        %461 = vst [vmem:[%s137 + $0x48] sm:$0xff] %v419
        %462 = vst [vmem:[%s137 + $0x50] sm:$0xff] %v424
        %463 = vst [vmem:[%s137 + $0x58] sm:$0xff] %v429
        %464 = vst [vmem:[%s137 + $0x60] sm:$0xff] %v434
        %465 = vst [vmem:[%s137 + $0x68] sm:$0xff] %v439
        %466 = vst [vmem:[%s137 + $0x70] sm:$0xff] %v444
        %467 = vst [vmem:[%s137 + $0x78] sm:$0xff] %v449
        %s468 = sand.u32 %s71, 1
        %s469 = scalar_lea.sflag [#allocation3], %s468
        %s470 = sand.u32 %s71, 1
        %s471 = smul.addr %s470, 128
        %s472 = scalar_lea.vmem [#allocation2], %s471
        // Predicated region
        $region29: #{tpu_custom_call.1} parent=27 // pred_check
          %p473 = pneg %p81
        $region30: #{tpu_custom_call.1} parent=27 // pred_check_branch
          %475 = sbr.rel (%p473) target = $region32
        $region31: #{tpu_custom_call.1} parent=27 // pred_region
          %s476 = smul.u32 16, %s16
          %s478 = ssub.s32 2048, 2048
          %479 = vsyncadd %s469, %s478
          %s480 = smul.addr %s476, 128
          %s481 = scalar_lea.hbm %s2, %s480
          %s482 = sshll.u32 %s472, 4
          %s483 = int_to_ptr.vmem [resolvable:$true] %s482
          %488 = dma.vmem_to_hbm [thread:$0]  %s483, 2048, %s481, %s469, 128, 128, 8
        $region32: #{tpu_custom_call.1} parent=27 // pred_fallthru
          _
      $region28: #{tpu_custom_call.1} parent=5 // pred_fallthru
        _
      %p489 = scmp.le.s32.totalorder 2, %s11
      // Predicated region
      $region33: #{tpu_custom_call.1} parent=5 // pred_check
        %p490 = pneg %p489
      $region34: #{tpu_custom_call.1} parent=5 // pred_check_branch
        %492 = sbr.rel (%p490) target = $region36
      $region35: #{tpu_custom_call.1} parent=5 // pred_region
        %s493 = ssub.s32 %s11, 2
        // Predicated region
        $region37: #{tpu_custom_call.1} parent=35 // pred_check
          %p494 = pneg %p87
        $region38: #{tpu_custom_call.1} parent=35 // pred_check_branch
          %496 = sbr.rel (%p494) target = $region40
        $region39: #{tpu_custom_call.1} parent=35 // pred_region
          %s497 = sand.u32 %s72, 1
          %s498 = scalar_lea.sflag [#allocation3], %s497
          %s499 = sand.u32 %s72, 1
          %s500 = smul.addr %s499, 128
          %s501 = scalar_lea.vmem [#allocation2], %s500
          %502 = dma.done %s498, 2048
        $region40: #{tpu_custom_call.1} parent=35 // pred_fallthru
          _
      $region36: #{tpu_custom_call.1} parent=5 // pred_fallthru
        _
    $region6: #{tpu_custom_call.1} parent=1 // loop_footer
      %s15 = sadd.s32 1, %s11
    $region7: #{tpu_custom_call.1} parent=1 // loop_footer_branch
      %10 = sbr.rel target = $region3
    $region8: #{tpu_custom_call.1} parent=1 // loop_exit
      _
    %503 = vsyncpa [#allocation3], 1
    %s504 = scalar_lea.sflag [#allocation3], 1
    %505 = vsyncpa %s504, 1

</llo_original>
